<compile_context>
chip_gen: v7x
topology: tpu7x:2x2x1
jax: 0.10.0
libtpu: 0.0.40
codegen_flags: <defaults>
</compile_context>

<pallas_src>
import jax
import jax.numpy as jnp
from jax.experimental import pallas as pl
from jax.experimental.pallas import tpu as pltpu


def _round_up(x, m):
    return ((x + m - 1) // m) * m


def _orthogonal(key, shape, gain=1.0):
    """Mimics torch.nn.init.orthogonal_ for a 2-D weight of `shape` (out, in)."""
    rows, cols = shape
    flat_shape = (rows, cols) if rows >= cols else (cols, rows)
    a = jax.random.normal(key, flat_shape, dtype=jnp.float32)
    q, r = jnp.linalg.qr(a)
    d = jnp.diagonal(r)
    q = q * jnp.sign(d)[None, :]
    if rows < cols:
        q = q.T
    return gain * q


def _mlp_head(s, a, w1s, w1a, b1, w2, b2, w3_row, b3):
    """One value head on a (TB, ·) batch tile.  All matmuls accumulate in f32 on the MXU;
    the final width-1 layer is a VPU multiply + XLU lane reduction (no MXU pass)."""
    h1 = jnp.dot(s, w1s, preferred_element_type=jnp.float32)
    h1 = h1 + jnp.dot(a, w1a, preferred_element_type=jnp.float32)
    h1 = jnp.maximum(h1 + b1, 0.0)
    h2 = jnp.dot(h1, w2, preferred_element_type=jnp.float32)
    h2 = jnp.maximum(h2 + b2, 0.0)
    q = jnp.sum(h2 * w3_row, axis=-1, keepdims=True) + b3
    return q


def _critic_kernel(s_ref, a_ref,
                   w1s_ref, w1a_ref, b1_ref, w2_ref, b2_ref, w3_ref, b3_ref,
                   q_ref):
    q = _mlp_head(s_ref[...], a_ref[...],
                  w1s_ref[...], w1a_ref[...], b1_ref[...],
                  w2_ref[...], b2_ref[...], w3_ref[...], b3_ref[0, 0])
    q_ref[...] = q.astype(q_ref.dtype)


def _critic_twin_kernel(s_ref, a_ref,
                        w1s1_ref, w1a1_ref, b11_ref, w21_ref, b21_ref, w31_ref, b31_ref,
                        w1s2_ref, w1a2_ref, b12_ref, w22_ref, b22_ref, w32_ref, b32_ref,
                        q1_ref, q2_ref):
    # Fused twin critic: x (the only large tensor) is read from HBM once per tile.
    s = s_ref[...]
    a = a_ref[...]
    q1_ref[...] = _mlp_head(s, a, w1s1_ref[...], w1a1_ref[...], b11_ref[...],
                            w21_ref[...], b21_ref[...], w31_ref[...],
                            b31_ref[0, 0]).astype(q1_ref.dtype)
    q2_ref[...] = _mlp_head(s, a, w1s2_ref[...], w1a2_ref[...], b12_ref[...],
                            w22_ref[...], b22_ref[...], w32_ref[...],
                            b32_ref[0, 0]).astype(q2_ref.dtype)


class CriticTwinPallas:
    """JAX/Pallas port of CriticTwin.

    forward(state, action)      -> Q1
    get_double_q(state, action) -> (Q1, Q2)   (single fused pallas_call)
    """

    # Batch-tile cap: 1024 f32 rows keeps the per-step footprint (double-buffered inputs +
    # (TB, 128) f32 intermediates + resident weights) far under v7x's 64 MiB VMEM.
    MAX_TILE_ROWS = 1024

    def __init__(self, n_states, n_actions, hidden_size, key):
        in_dim = n_states + n_actions
        std, bias_const = 1.0, 1e-06
        H = hidden_size
        Hp = _round_up(hidden_size, 128)   # lane/MXU-friendly padded hidden width
        self.n_states, self.n_actions = n_states, n_actions
        self.hidden_size, self.hidden_pad = H, Hp
        ks = jax.random.split(key, 6)

        def make_value(keys):
            # torch Linear weight is (out, in); transpose to (in, out) so kernel does x @ W.
            w1 = _orthogonal(keys[0], (H, in_dim), std).T   # (in_dim, H)
            w2 = _orthogonal(keys[1], (H, H), std).T        # (H, H)
            w3 = _orthogonal(keys[2], (1, H), std)          # (1, H)
            # Split w1 by input (state | action) -> no host-side concat needed; zero-pad the
            # hidden dim to Hp.  Padded units get zero weights AND zero bias so they remain
            # exactly 0 through both ReLUs (no 1e-6 leakage).
            w1s = jnp.zeros((n_states, Hp), jnp.float32).at[:, :H].set(w1[:n_states])
            w1a = jnp.zeros((n_actions, Hp), jnp.float32).at[:, :H].set(w1[n_states:])
            w2p = jnp.zeros((Hp, Hp), jnp.float32).at[:H, :H].set(w2)
            w3p = jnp.zeros((1, Hp), jnp.float32).at[:, :H].set(w3)
            b1 = jnp.zeros((1, Hp), jnp.float32).at[:, :H].set(bias_const)
            b2 = jnp.zeros((1, Hp), jnp.float32).at[:, :H].set(bias_const)
            b3 = jnp.full((1, 1), bias_const, jnp.float32)  # scalar, lives in SMEM
            return (w1s, w1a, b1, w2p, b2, w3p, b3)

        self.value1 = make_value(ks[:3])
        self.value2 = make_value(ks[3:])

    # ------------------------------------------------------------------ pallas dispatch
    def _run(self, state, action, param_sets):
        state = state.astype(jnp.float32)
        action = action.astype(jnp.float32)
        B, n_s = state.shape
        n_a = action.shape[1]

        # Batch tile: multiple of 8 sublanes, capped; pad ragged batches with zero rows.
        TB = min(self.MAX_TILE_ROWS, _round_up(B, 8))
        Bp = _round_up(B, TB)
        if Bp != B:
            pad = Bp - B
            state = jnp.pad(state, ((0, pad), (0, 0)))
            action = jnp.pad(action, ((0, pad), (0, 0)))
        grid = (Bp // TB,)

        in_specs = [
            pl.BlockSpec((TB, n_s), lambda i: (i, 0)),   # state tile (streamed per step)
            pl.BlockSpec((TB, n_a), lambda i: (i, 0)),   # action tile (streamed per step)
        ]
        flat_params = []
        for (w1s, w1a, b1, w2, b2, w3, b3) in param_sets:
            for w in (w1s, w1a, b1, w2, b2, w3):
                # Weights/biases: full-array blocks, index_map pinned to (0,0) -> VMEM-resident.
                in_specs.append(pl.BlockSpec(w.shape, lambda i: (0, 0)))
                flat_params.append(w)
            in_specs.append(pl.BlockSpec(memory_space=pltpu.SMEM))  # b3 scalar in SMEM
            flat_params.append(b3)

        n_heads = len(param_sets)
        out_shape = tuple(jax.ShapeDtypeStruct((Bp, 1), jnp.float32) for _ in range(n_heads))
        out_specs = tuple(pl.BlockSpec((TB, 1), lambda i: (i, 0)) for _ in range(n_heads))
        kernel = _critic_kernel if n_heads == 1 else _critic_twin_kernel

        outs = pl.pallas_call(
            kernel,
            grid=grid,
            out_shape=out_shape,
            in_specs=in_specs,
            out_specs=out_specs,
            compiler_params=pltpu.CompilerParams(
                dimension_semantics=("parallel",),      # shard batch tiles across TCs (v7x)
                vmem_limit_bytes=48 * 1024 * 1024,      # sized for v7x's 64 MiB VMEM
            ),
        )(state, action, *flat_params)

        if not isinstance(outs, (list, tuple)):
            outs = (outs,)
        return tuple(o[:B] for o in outs)

    # ------------------------------------------------------------------ public API
    def forward(self, state, action):
        (q1,) = self._run(state, action, (self.value1,))
        return q1

    def get_double_q(self, state, action):
        q1, q2 = self._run(state, action, (self.value1, self.value2))
        return q1, q2


def _reference(state, action, params):
    """Pure-JAX reference, numerically identical formulation to the kernel."""
    w1s, w1a, b1, w2, b2, w3, b3 = params
    h1 = jnp.maximum(state @ w1s + action @ w1a + b1, 0.0)
    h2 = jnp.maximum(h1 @ w2 + b2, 0.0)
    return jnp.sum(h2 * w3, axis=-1, keepdims=True) + b3


if __name__ == "__main__":
    key = jax.random.PRNGKey(0)
    k_param, k_state, k_action = jax.random.split(key, 3)

    batch, n_states, n_actions, hidden_size = 8, 12, 4, 32
    critic = CriticTwinPallas(n_states, n_actions, hidden_size, k_param)

    state = jax.random.normal(k_state, (batch, n_states), dtype=jnp.float32)
    action = jax.random.normal(k_action, (batch, n_actions), dtype=jnp.float32)

    q1 = critic.forward(state, action)
    q1d, q2d = critic.get_double_q(state, action)
    jax.block_until_ready((q1, q1d, q2d))

    ref1 = _reference(state, action, critic.value1)
    ref2 = _reference(state, action, critic.value2)
    assert q1.shape == (batch, 1)
    assert q1d.shape == (batch, 1) and q2d.shape == (batch, 1)
    assert jnp.allclose(q1, ref1, atol=1e-5, rtol=1e-5)
    assert jnp.allclose(q1d, ref1, atol=1e-5, rtol=1e-5)
    assert jnp.allclose(q2d, ref2, atol=1e-5, rtol=1e-5)

    # Ragged batch (exercises zero-pad + slice path for B not a multiple of 8).
    q1_r = critic.forward(state[:5], action[:5])
    jax.block_until_ready(q1_r)
    assert q1_r.shape == (5, 1)
    assert jnp.allclose(q1_r, ref1[:5], atol=1e-5, rtol=1e-5)

    print("KERNEL_OK")
</pallas_src>

<mosaic_0001>
module attributes {stable_mosaic.version = 11 : i64} {
  func.func @_critic_kernel(%arg0: i32, %arg1: memref<8x12xf32, #tpu.memory_space<vmem>>, %arg2: memref<8x4xf32, #tpu.memory_space<vmem>>, %arg3: memref<12x128xf32, #tpu.memory_space<vmem>>, %arg4: memref<4x128xf32, #tpu.memory_space<vmem>>, %arg5: memref<1x128xf32, #tpu.memory_space<vmem>>, %arg6: memref<128x128xf32, #tpu.memory_space<vmem>>, %arg7: memref<1x128xf32, #tpu.memory_space<vmem>>, %arg8: memref<1x128xf32, #tpu.memory_space<vmem>>, %arg9: memref<1x1xf32, #tpu.memory_space<smem>>, %arg10: memref<8x1xf32, #tpu.memory_space<vmem>>) attributes {dimension_semantics = [#tpu.dimension_semantics<parallel>], iteration_bounds = array<i64: 1>, scalar_prefetch = 0 : i64, scratch_operands = 0 : i64, tpu.core_type = #tpu.core_type<tc>, window_params = [{transform_indices = @transform_0, window_bounds = array<i64: 8, 12>}, {transform_indices = @transform_1, window_bounds = array<i64: 8, 4>}, {pipeline_mode = #tpu.pipeline_mode<synchronous>, transform_indices = @transform_2, window_bounds = array<i64: 12, 128>}, {pipeline_mode = #tpu.pipeline_mode<synchronous>, transform_indices = @transform_3, window_bounds = array<i64: 4, 128>}, {pipeline_mode = #tpu.pipeline_mode<synchronous>, transform_indices = @transform_4, window_bounds = array<i64: 1, 128>}, {pipeline_mode = #tpu.pipeline_mode<synchronous>, transform_indices = @transform_5, window_bounds = array<i64: 128, 128>}, {pipeline_mode = #tpu.pipeline_mode<synchronous>, transform_indices = @transform_6, window_bounds = array<i64: 1, 128>}, {pipeline_mode = #tpu.pipeline_mode<synchronous>, transform_indices = @transform_7, window_bounds = array<i64: 1, 128>}, {transform_indices = @transform_8, window_bounds = array<i64: 1, 1>}, {transform_indices = @transform_9, window_bounds = array<i64: 8, 1>}]} {
    %c0 = arith.constant 0 : index
    %c0_0 = arith.constant 0 : index
    %0 = vector.load %arg1[%c0, %c0_0] : memref<8x12xf32, #tpu.memory_space<vmem>>, vector<8x12xf32>
    %c0_1 = arith.constant 0 : index
    %c0_2 = arith.constant 0 : index
    %1 = vector.load %arg2[%c0_1, %c0_2] : memref<8x4xf32, #tpu.memory_space<vmem>>, vector<8x4xf32>
    %c0_3 = arith.constant 0 : index
    %c0_4 = arith.constant 0 : index
    %2 = vector.load %arg3[%c0_3, %c0_4] : memref<12x128xf32, #tpu.memory_space<vmem>>, vector<12x128xf32>
    %c0_5 = arith.constant 0 : index
    %c0_6 = arith.constant 0 : index
    %3 = vector.load %arg4[%c0_5, %c0_6] : memref<4x128xf32, #tpu.memory_space<vmem>>, vector<4x128xf32>
    %c0_7 = arith.constant 0 : index
    %c0_8 = arith.constant 0 : index
    %4 = vector.load %arg5[%c0_7, %c0_8] : memref<1x128xf32, #tpu.memory_space<vmem>>, vector<1x128xf32>
    %c0_9 = arith.constant 0 : index
    %c0_10 = arith.constant 0 : index
    %5 = vector.load %arg6[%c0_9, %c0_10] : memref<128x128xf32, #tpu.memory_space<vmem>>, vector<128x128xf32>
    %c0_11 = arith.constant 0 : index
    %c0_12 = arith.constant 0 : index
    %6 = vector.load %arg7[%c0_11, %c0_12] : memref<1x128xf32, #tpu.memory_space<vmem>>, vector<1x128xf32>
    %c0_13 = arith.constant 0 : index
    %c0_14 = arith.constant 0 : index
    %7 = vector.load %arg8[%c0_13, %c0_14] : memref<1x128xf32, #tpu.memory_space<vmem>>, vector<1x128xf32>
    %c0_15 = arith.constant 0 : index
    %c0_16 = arith.constant 0 : index
    %8 = memref.load %arg9[%c0_15, %c0_16] : memref<1x1xf32, #tpu.memory_space<smem>>
    %cst = arith.constant dense<0.000000e+00> : vector<8x128xf32>
    %9 = tpu.matmul %0, %2, %cst {dimension_numbers = #tpu.dot_dimension_numbers<[1], [0], [0], [1], [0, 0, 1, 1], [], []>} : vector<8x12xf32>, vector<12x128xf32>, vector<8x128xf32> -> vector<8x128xf32>
    %cst_17 = arith.constant dense<0.000000e+00> : vector<8x128xf32>
    %10 = tpu.matmul %1, %3, %cst_17 {dimension_numbers = #tpu.dot_dimension_numbers<[1], [0], [0], [1], [0, 0, 1, 1], [], []>} : vector<8x4xf32>, vector<4x128xf32>, vector<8x128xf32> -> vector<8x128xf32>
    %11 = arith.addf %9, %10 : vector<8x128xf32>
    %12 = vector.broadcast %4 : vector<1x128xf32> to vector<8x128xf32>
    %13 = arith.addf %11, %12 : vector<8x128xf32>
    %cst_18 = arith.constant 0.000000e+00 : f32
    %14 = vector.broadcast %cst_18 : f32 to vector<8x128xf32>
    %15 = arith.maximumf %13, %14 : vector<8x128xf32>
    %cst_19 = arith.constant dense<0.000000e+00> : vector<8x128xf32>
    %16 = tpu.matmul %15, %5, %cst_19 {dimension_numbers = #tpu.dot_dimension_numbers<[1], [0], [0], [1], [0, 0, 1, 1], [], []>} : vector<8x128xf32>, vector<128x128xf32>, vector<8x128xf32> -> vector<8x128xf32>
    %17 = vector.broadcast %6 : vector<1x128xf32> to vector<8x128xf32>
    %18 = arith.addf %16, %17 : vector<8x128xf32>
    %cst_20 = arith.constant 0.000000e+00 : f32
    %19 = vector.broadcast %cst_20 : f32 to vector<8x128xf32>
    %20 = arith.maximumf %18, %19 : vector<8x128xf32>
    %21 = vector.broadcast %7 : vector<1x128xf32> to vector<8x128xf32>
    %22 = arith.mulf %20, %21 : vector<8x128xf32>
    %cst_21 = arith.constant dense<0.000000e+00> : vector<8xf32>
    %23 = vector.multi_reduction <add>, %22, %cst_21 [1] : vector<8x128xf32> to vector<8xf32>
    %24 = vector.shape_cast %23 : vector<8xf32> to vector<8x1xf32>
    %25 = vector.broadcast %8 : f32 to vector<8x1xf32>
    %26 = arith.addf %24, %25 : vector<8x1xf32>
    %c0_22 = arith.constant 0 : index
    %c0_23 = arith.constant 0 : index
    %27 = vector.load %arg10[%c0_22, %c0_23] : memref<8x1xf32, #tpu.memory_space<vmem>>, vector<8x1xf32>
    tpu.vector_store %arg10[%c0_22, %c0_23], %26 {strides = array<i32>} : memref<8x1xf32, #tpu.memory_space<vmem>>, vector<8x1xf32>,
    return
  }
  func.func @transform_0(%arg0: i32) -> (i32, i32) {
    %c0_i32 = arith.constant 0 : i32
    %c0_i32_0 = arith.constant 0 : i32
    return %arg0, %c0_i32 : i32, i32
  }
  func.func @transform_1(%arg0: i32) -> (i32, i32) {
    %c0_i32 = arith.constant 0 : i32
    %c0_i32_0 = arith.constant 0 : i32
    return %arg0, %c0_i32 : i32, i32
  }
  func.func @transform_2(%arg0: i32) -> (i32, i32) {
    %c0_i32 = arith.constant 0 : i32
    %c0_i32_0 = arith.constant 0 : i32
    %c0_i32_1 = arith.constant 0 : i32
    return %c0_i32, %c0_i32_0 : i32, i32
  }
  func.func @transform_3(%arg0: i32) -> (i32, i32) {
    %c0_i32 = arith.constant 0 : i32
    %c0_i32_0 = arith.constant 0 : i32
    %c0_i32_1 = arith.constant 0 : i32
    return %c0_i32, %c0_i32_0 : i32, i32
  }
  func.func @transform_4(%arg0: i32) -> (i32, i32) {
    %c0_i32 = arith.constant 0 : i32
    %c0_i32_0 = arith.constant 0 : i32
    %c0_i32_1 = arith.constant 0 : i32
    return %c0_i32, %c0_i32_0 : i32, i32
  }
  func.func @transform_5(%arg0: i32) -> (i32, i32) {
    %c0_i32 = arith.constant 0 : i32
    %c0_i32_0 = arith.constant 0 : i32
    %c0_i32_1 = arith.constant 0 : i32
    return %c0_i32, %c0_i32_0 : i32, i32
  }
  func.func @transform_6(%arg0: i32) -> (i32, i32) {
    %c0_i32 = arith.constant 0 : i32
    %c0_i32_0 = arith.constant 0 : i32
    %c0_i32_1 = arith.constant 0 : i32
    return %c0_i32, %c0_i32_0 : i32, i32
  }
  func.func @transform_7(%arg0: i32) -> (i32, i32) {
    %c0_i32 = arith.constant 0 : i32
    %c0_i32_0 = arith.constant 0 : i32
    %c0_i32_1 = arith.constant 0 : i32
    return %c0_i32, %c0_i32_0 : i32, i32
  }
  func.func @transform_8(%arg0: i32) -> (i32, i32) {
    %c0_i32 = arith.constant 0 : i32
    %c0_i32_0 = arith.constant 0 : i32
    %c0_i32_1 = arith.constant 0 : i32
    return %c0_i32, %c0_i32_0 : i32, i32
  }
  func.func @transform_9(%arg0: i32) -> (i32, i32) {
    %c0_i32 = arith.constant 0 : i32
    %c0_i32_0 = arith.constant 0 : i32
    return %arg0, %c0_i32 : i32, i32
  }
}

</mosaic_0001>

<llo_original>
// kernel: tpu_custom_call.1
$region0: #{tpu_custom_call.1}
  #allocation0 [shape = 'u32[]', space=smem, size = 0x4, offset = 0x4, fixed_abs, tag = 'smem constant byte address 0x4 - core index']
  #allocation1 [shape = 'u32[144,128]{1,0:T(1,128)}', space=vmem, size = 0x12000, scoped, tag = 'internal scratch']
  #allocation2 [shape = 'f32[1,1]{1,0:T(1,128)S(6)}', space=smem, size = 0x200, scoped, tag = 'scoped memory for tpu_custom_call.1']
  %s0 = inlined_call_operand.hbm [shape: f32[8,12], index: 0, kind: input, shape index: {}]
  %s1 = inlined_call_operand.vmem [shape: f32[8,4], index: 1, kind: input, shape index: {}]
  %s2 = inlined_call_operand.vmem [shape: f32[12,128], index: 2, kind: input, shape index: {}]
  %s3 = inlined_call_operand.vmem [shape: f32[4,128], index: 3, kind: input, shape index: {}]
  %s4 = inlined_call_operand.vmem [shape: f32[1,128], index: 4, kind: input, shape index: {}]
  %s5 = inlined_call_operand.hbm [shape: f32[128,128], index: 5, kind: input, shape index: {}]
  %s6 = inlined_call_operand.vmem [shape: f32[1,128], index: 6, kind: input, shape index: {}]
  %s7 = inlined_call_operand.vmem [shape: f32[1,128], index: 7, kind: input, shape index: {}]
  %s8 = inlined_call_operand.<no memory space> [shape: f32[1,1], index: 8, kind: input, shape index: {}]
  %s9 = inlined_call_operand.vmem [shape: f32[8,1], index: 9, kind: output, shape index: {}]
  %s10 = sld [smem:[#allocation0]]
  $region54: #{tpu_custom_call.1} parent=0
    _
  %s12 = ssub.s32 1, %s10
  %s13 = scalar_select 0, %s12, %s10
  %14 = sst [smem:[#allocation2]] %s8
  $region1: #{tpu_custom_call.1} parent=0
    #allocation3 [shape = 'u8[4096]{0}', space=vmem, size = 0x1000, scoped, tag = 'input window, operand 0, single buffered']
    #allocation4 [shape = 's32[1]{0}', space=sflag, size = 0x4, scoped, tag = 'scoped memory for tpu_custom_call.1']
    #allocation5 [shape = 'u8[65536]{0}', space=vmem, size = 0x10000, scoped, tag = 'input window, operand 5, single buffered']
    #allocation6 [shape = 's32[1]{0}', space=sflag, size = 0x4, scoped, tag = 'scoped memory for tpu_custom_call.1']
    %15 = vsyncpa [#allocation4], 0
    %16 = vsyncpa [#allocation6], 0
    // Predicated region
    $region2: #{tpu_custom_call.1} parent=1 // pred_check
      _
    $region3: #{tpu_custom_call.1} parent=1 // pred_check_branch
      %18 = sbr.rel (0) target = $region5
    $region4: #{tpu_custom_call.1} parent=1 // pred_region
      %s20 = ssub.s32 128, 128
      %21 = vsyncadd [#allocation4], %s20
      %s23 = sshll.u32 [#allocation3], 4
      %s24 = int_to_ptr.vmem [resolvable:$true] %s23
      %26 = dma.hbm_to_vmem [thread:$0]  %s0, 128, %s24, [#allocation4]
    $region5: #{tpu_custom_call.1} parent=1 // pred_fallthru
      _
    // Predicated region
    $region6: #{tpu_custom_call.1} parent=1 // pred_check
      _
    $region7: #{tpu_custom_call.1} parent=1 // pred_check_branch
      %28 = sbr.rel (0) target = $region9
    $region8: #{tpu_custom_call.1} parent=1 // pred_region
      _
    $region9: #{tpu_custom_call.1} parent=1 // pred_fallthru
      _
    // Predicated region
    $region10: #{tpu_custom_call.1} parent=1 // pred_check
      _
    $region11: #{tpu_custom_call.1} parent=1 // pred_check_branch
      %30 = sbr.rel (0) target = $region13
    $region12: #{tpu_custom_call.1} parent=1 // pred_region
      _
    $region13: #{tpu_custom_call.1} parent=1 // pred_fallthru
      _
    // Predicated region
    $region14: #{tpu_custom_call.1} parent=1 // pred_check
      _
    $region15: #{tpu_custom_call.1} parent=1 // pred_check_branch
      %32 = sbr.rel (0) target = $region17
    $region16: #{tpu_custom_call.1} parent=1 // pred_region
      _
    $region17: #{tpu_custom_call.1} parent=1 // pred_fallthru
      _
    // Predicated region
    $region18: #{tpu_custom_call.1} parent=1 // pred_check
      _
    $region19: #{tpu_custom_call.1} parent=1 // pred_check_branch
      %34 = sbr.rel (0) target = $region21
    $region20: #{tpu_custom_call.1} parent=1 // pred_region
      _
    $region21: #{tpu_custom_call.1} parent=1 // pred_fallthru
      _
    // Predicated region
    $region22: #{tpu_custom_call.1} parent=1 // pred_check
      _
    $region23: #{tpu_custom_call.1} parent=1 // pred_check_branch
      %36 = sbr.rel (0) target = $region25
    $region24: #{tpu_custom_call.1} parent=1 // pred_region
      %s38 = ssub.s32 2048, 2048
      %39 = vsyncadd [#allocation6], %s38
      %s40 = sshll.u32 [#allocation5], 4
      %s41 = int_to_ptr.vmem [resolvable:$true] %s40
      %46 = dma.hbm_to_vmem [thread:$0]  %s5, 2048, %s41, [#allocation6], 128, 128, 8
    $region25: #{tpu_custom_call.1} parent=1 // pred_fallthru
      _
    // Predicated region
    $region26: #{tpu_custom_call.1} parent=1 // pred_check
      _
    $region27: #{tpu_custom_call.1} parent=1 // pred_check_branch
      %48 = sbr.rel (0) target = $region29
    $region28: #{tpu_custom_call.1} parent=1 // pred_region
      _
    $region29: #{tpu_custom_call.1} parent=1 // pred_fallthru
      _
    // Predicated region
    $region30: #{tpu_custom_call.1} parent=1 // pred_check
      _
    $region31: #{tpu_custom_call.1} parent=1 // pred_check_branch
      %50 = sbr.rel (0) target = $region33
    $region32: #{tpu_custom_call.1} parent=1 // pred_region
      _
    $region33: #{tpu_custom_call.1} parent=1 // pred_fallthru
      _
    // Predicated region
    $region34: #{tpu_custom_call.1} parent=1 // pred_check
      _
    $region35: #{tpu_custom_call.1} parent=1 // pred_check_branch
      %52 = sbr.rel (0) target = $region37
    $region36: #{tpu_custom_call.1} parent=1 // pred_region
      _
    $region37: #{tpu_custom_call.1} parent=1 // pred_fallthru
      _
    // Predicated region
    $region38: #{tpu_custom_call.1} parent=1 // pred_check
      _
    $region39: #{tpu_custom_call.1} parent=1 // pred_check_branch
      %54 = sbr.rel (0) target = $region41
    $region40: #{tpu_custom_call.1} parent=1 // pred_region
      %55 = dma.done [#allocation4], 128
    $region41: #{tpu_custom_call.1} parent=1 // pred_fallthru
      _
    // Predicated region
    $region42: #{tpu_custom_call.1} parent=1 // pred_check
      _
    $region43: #{tpu_custom_call.1} parent=1 // pred_check_branch
      %57 = sbr.rel (0) target = $region45
    $region44: #{tpu_custom_call.1} parent=1 // pred_region
      %58 = dma.done [#allocation6], 2048
    $region45: #{tpu_custom_call.1} parent=1 // pred_fallthru
      _
    %v59 = vld [vmem:[#allocation3] sm:$0xff]
    %v60 = vld [vmem:[%s1] sm:$0xff]
    %v61 = vld [vmem:[%s2] sm:$0xff]
    %v62 = vld [vmem:[%s2 + $0x8] sm:$0xf]
    %v63 = vld [vmem:[%s3] sm:$0xf]
    %v64 = vld [vmem:[%s4] sm:$0x1]
    %v65 = vld [vmem:[#allocation5] sm:$0xff]
    %v66 = vld [vmem:[#allocation5 + $0x8] sm:$0xff]
    %v67 = vld [vmem:[#allocation5 + $0x10] sm:$0xff]
    %v68 = vld [vmem:[#allocation5 + $0x18] sm:$0xff]
    %v69 = vld [vmem:[#allocation5 + $0x20] sm:$0xff]
    %v70 = vld [vmem:[#allocation5 + $0x28] sm:$0xff]
    %v71 = vld [vmem:[#allocation5 + $0x30] sm:$0xff]
    %v72 = vld [vmem:[#allocation5 + $0x38] sm:$0xff]
    %v73 = vld [vmem:[#allocation5 + $0x40] sm:$0xff]
    %v74 = vld [vmem:[#allocation5 + $0x48] sm:$0xff]
    %v75 = vld [vmem:[#allocation5 + $0x50] sm:$0xff]
    %v76 = vld [vmem:[#allocation5 + $0x58] sm:$0xff]
    %v77 = vld [vmem:[#allocation5 + $0x60] sm:$0xff]
    %v78 = vld [vmem:[#allocation5 + $0x68] sm:$0xff]
    %v79 = vld [vmem:[#allocation5 + $0x70] sm:$0xff]
    %v80 = vld [vmem:[#allocation5 + $0x78] sm:$0xff]
    %v81 = vld [vmem:[%s6] sm:$0x1]
    %v82 = vld [vmem:[%s7] sm:$0x1]
    %s83 = sld [smem:[#allocation2]]
    %vm84 = vcmask 31744
    %v86 = vsel %vm84, %v60, 0
    %vm88 = vcmask 1043456
    %v90 = vsel %vm88, %v63, 0
    %92 = vmatprep.subr.mxu0 0.0
    %93 = vmatpush1.msra.mxu0 %v90
    %94 = vmatprep.subr.mxu0 0.0
    %95 = vmatpush1.msra.mxu0 0.0
    %96 = vmatprep.subr.mxu0 0.0
    %97 = vmatpush1.msra.mxu0 0.0
    %98 = vmatprep.subr.mxu0 0.0
    %99 = vmatpush1.msra.mxu0 0.0
    %100 = vmatprep.subr.mxu0 0.0
    %101 = vmatpush1.msra.mxu0 0.0
    %102 = vmatprep.subr.mxu0 0.0
    %103 = vmatpush1.msra.mxu0 0.0
    %104 = vmatprep.subr.mxu0 0.0
    %105 = vmatpush1.msra.mxu0 0.0
    %106 = vmatprep.subr.mxu0 0.0
    %107 = vmatpush1.msra.mxu0 0.0
    %108 = vmatprep.subr.mxu0 0.0
    %109 = vmatpush1.msra.mxu0 0.0
    %110 = vmatprep.subr.mxu0 0.0
    %111 = vmatpush1.msra.mxu0 0.0
    %112 = vmatprep.subr.mxu0 0.0
    %113 = vmatpush1.msra.mxu0 0.0
    %114 = vmatprep.subr.mxu0 0.0
    %115 = vmatpush1.msra.mxu0 0.0
    %116 = vmatprep.subr.mxu0 0.0
    %117 = vmatpush1.msra.mxu0 0.0
    %118 = vmatprep.subr.mxu0 0.0
    %119 = vmatpush1.msra.mxu0 0.0
    %120 = vmatprep.subr.mxu0 0.0
    %121 = vmatpush1.msra.mxu0 0.0
    %122 = vmatprep.subr.mxu0 0.0
    %123 = vmatpush1.msra.mxu0 0.0
    %124 = vmatprep.subr.mxu0 0.0
    %125 = vmatpush1.msra.mxu0 0.0
    %126 = vmatprep.subr.mxu0 0.0
    %127 = vmatpush1.msra.mxu0 0.0
    %128 = vmatprep.subr.mxu0 0.0
    %129 = vmatpush1.msra.mxu0 0.0
    %130 = vmatprep.subr.mxu0 0.0
    %131 = vmatpush1.msra.mxu0 0.0
    %132 = vmatprep.subr.mxu0 0.0
    %133 = vmatpush1.msra.mxu0 0.0
    %134 = vmatprep.subr.mxu0 0.0
    %135 = vmatpush1.msra.mxu0 0.0
    %136 = vmatprep.subr.mxu0 0.0
    %137 = vmatpush1.msra.mxu0 0.0
    %138 = vmatprep.subr.mxu0 0.0
    %139 = vmatpush1.msra.mxu0 0.0
    %140 = vmatprep.subr.mxu0 0.0
    %141 = vmatpush1.msra.mxu0 0.0
    %142 = vmatprep.subr.mxu0 0.0
    %143 = vmatpush1.msra.mxu0 0.0
    %144 = vmatprep.subr.mxu0 0.0
    %145 = vmatpush1.msra.mxu0 0.0
    %146 = vmatprep.subr.mxu0 0.0
    %147 = vmatpush1.msra.mxu0 0.0
    %148 = vmatprep.subr.mxu0 0.0
    %149 = vmatpush1.msra.mxu0 0.0
    %150 = vmatprep.subr.mxu0 0.0
    %151 = vmatpush1.msra.mxu0 0.0
    %152 = vmatprep.subr.mxu0 0.0
    %153 = vmatpush1.msra.mxu0 0.0
    %154 = vmatprep.subr.mxu0 0.0
    %155 = vmatpush1.msra.mxu0 0.0
    %156 = vmatprep.mubr.f32.mxu0 0.0
    %157 = vmatmul.mubr.f32.gmra.mrb[0].mxu0 %v86
    %v158 = vpop.f32.mrb[0].mxu0
    %v159 = vadd.f32 0.0, %v158
    %v160 = vpop.f32.mrb[0].mxu0
    %161 = vdwg.mxu0
    %vm162 = vcmask 97280
    %v164 = vsel %vm162, %v59, 0
    %v167 = vsel %vm88, %v62, 0
    %169 = vmatprep.subr.mxu0 0.0
    %170 = vmatpush1.msra.mxu0 %v61
    %171 = vmatprep.subr.mxu0 0.0
    %172 = vmatpush1.msra.mxu0 %v167
    %173 = vmatprep.subr.mxu0 0.0
    %174 = vmatpush1.msra.mxu0 0.0
    %175 = vmatprep.subr.mxu0 0.0
    %176 = vmatpush1.msra.mxu0 0.0
    %177 = vmatprep.subr.mxu0 0.0
    %178 = vmatpush1.msra.mxu0 0.0
    %179 = vmatprep.subr.mxu0 0.0
    %180 = vmatpush1.msra.mxu0 0.0
    %181 = vmatprep.subr.mxu0 0.0
    %182 = vmatpush1.msra.mxu0 0.0
    %183 = vmatprep.subr.mxu0 0.0
    %184 = vmatpush1.msra.mxu0 0.0
    %185 = vmatprep.subr.mxu0 0.0
    %186 = vmatpush1.msra.mxu0 0.0
    %187 = vmatprep.subr.mxu0 0.0
    %188 = vmatpush1.msra.mxu0 0.0
    %189 = vmatprep.subr.mxu0 0.0
    %190 = vmatpush1.msra.mxu0 0.0
    %191 = vmatprep.subr.mxu0 0.0
    %192 = vmatpush1.msra.mxu0 0.0
    %193 = vmatprep.subr.mxu0 0.0
    %194 = vmatpush1.msra.mxu0 0.0
    %195 = vmatprep.subr.mxu0 0.0
    %196 = vmatpush1.msra.mxu0 0.0
    %197 = vmatprep.subr.mxu0 0.0
    %198 = vmatpush1.msra.mxu0 0.0
    %199 = vmatprep.subr.mxu0 0.0
    %200 = vmatpush1.msra.mxu0 0.0
    %201 = vmatprep.subr.mxu0 0.0
    %202 = vmatpush1.msra.mxu0 0.0
    %203 = vmatprep.subr.mxu0 0.0
    %204 = vmatpush1.msra.mxu0 0.0
    %205 = vmatprep.subr.mxu0 0.0
    %206 = vmatpush1.msra.mxu0 0.0
    %207 = vmatprep.subr.mxu0 0.0
    %208 = vmatpush1.msra.mxu0 0.0
    %209 = vmatprep.subr.mxu0 0.0
    %210 = vmatpush1.msra.mxu0 0.0
    %211 = vmatprep.subr.mxu0 0.0
    %212 = vmatpush1.msra.mxu0 0.0
    %213 = vmatprep.subr.mxu0 0.0
    %214 = vmatpush1.msra.mxu0 0.0
    %215 = vmatprep.subr.mxu0 0.0
    %216 = vmatpush1.msra.mxu0 0.0
    %217 = vmatprep.subr.mxu0 0.0
    %218 = vmatpush1.msra.mxu0 0.0
    %219 = vmatprep.subr.mxu0 0.0
    %220 = vmatpush1.msra.mxu0 0.0
    %221 = vmatprep.subr.mxu0 0.0
    %222 = vmatpush1.msra.mxu0 0.0
    %223 = vmatprep.subr.mxu0 0.0
    %224 = vmatpush1.msra.mxu0 0.0
    %225 = vmatprep.subr.mxu0 0.0
    %226 = vmatpush1.msra.mxu0 0.0
    %227 = vmatprep.subr.mxu0 0.0
    %228 = vmatpush1.msra.mxu0 0.0
    %229 = vmatprep.subr.mxu0 0.0
    %230 = vmatpush1.msra.mxu0 0.0
    %231 = vmatprep.subr.mxu0 0.0
    %232 = vmatpush1.msra.mxu0 0.0
    %233 = vmatprep.mubr.f32.mxu0 0.0
    %234 = vmatmul.mubr.f32.gmra.mrb[0].mxu0 %v164
    %v235 = vpop.f32.mrb[0].mxu0
    %v236 = vadd.f32 %v159, %v235
    %v237 = vpop.f32.mrb[0].mxu0
    %238 = vdwg.mxu0
    %v240 = vlaneseq
    %v241 = vshrl.u32 %v240, 7
    %v242 = vsub.s32 0, %v241
    %v243 = vrot.slane %v64, %v242
    %v245 = vadd.f32 %v236, %v243
    %v246 = vmax.f32 %v245, 0.0
    %v248 = vlaneseq
    %v249 = vshrl.u32 %v248, 7
    %v250 = vsub.s32 0, %v249
    %v251 = vrot.slane %v81, %v250
    %253 = vmatprep.subr.mxu0 0.0
    %254 = vmatpush1.msra.mxu0 %v65
    %255 = vmatprep.subr.mxu0 0.0
    %256 = vmatpush1.msra.mxu0 %v66
    %257 = vmatprep.subr.mxu0 0.0
    %258 = vmatpush1.msra.mxu0 %v67
    %259 = vmatprep.subr.mxu0 0.0
    %260 = vmatpush1.msra.mxu0 %v68
    %261 = vmatprep.subr.mxu0 0.0
    %262 = vmatpush1.msra.mxu0 %v69
    %263 = vmatprep.subr.mxu0 0.0
    %264 = vmatpush1.msra.mxu0 %v70
    %265 = vmatprep.subr.mxu0 0.0
    %266 = vmatpush1.msra.mxu0 %v71
    %267 = vmatprep.subr.mxu0 0.0
    %268 = vmatpush1.msra.mxu0 %v72
    %269 = vmatprep.subr.mxu0 0.0
    %270 = vmatpush1.msra.mxu0 %v73
    %271 = vmatprep.subr.mxu0 0.0
    %272 = vmatpush1.msra.mxu0 %v74
    %273 = vmatprep.subr.mxu0 0.0
    %274 = vmatpush1.msra.mxu0 %v75
    %275 = vmatprep.subr.mxu0 0.0
    %276 = vmatpush1.msra.mxu0 %v76
    %277 = vmatprep.subr.mxu0 0.0
    %278 = vmatpush1.msra.mxu0 %v77
    %279 = vmatprep.subr.mxu0 0.0
    %280 = vmatpush1.msra.mxu0 %v78
    %281 = vmatprep.subr.mxu0 0.0
    %282 = vmatpush1.msra.mxu0 %v79
    %283 = vmatprep.subr.mxu0 0.0
    %284 = vmatpush1.msra.mxu0 %v80
    %285 = vmatprep.subr.mxu0 0.0
    %286 = vmatpush1.msra.mxu0 0.0
    %287 = vmatprep.subr.mxu0 0.0
    %288 = vmatpush1.msra.mxu0 0.0
    %289 = vmatprep.subr.mxu0 0.0
    %290 = vmatpush1.msra.mxu0 0.0
    %291 = vmatprep.subr.mxu0 0.0
    %292 = vmatpush1.msra.mxu0 0.0
    %293 = vmatprep.subr.mxu0 0.0
    %294 = vmatpush1.msra.mxu0 0.0
    %295 = vmatprep.subr.mxu0 0.0
    %296 = vmatpush1.msra.mxu0 0.0
    %297 = vmatprep.subr.mxu0 0.0
    %298 = vmatpush1.msra.mxu0 0.0
    %299 = vmatprep.subr.mxu0 0.0
    %300 = vmatpush1.msra.mxu0 0.0
    %301 = vmatprep.subr.mxu0 0.0
    %302 = vmatpush1.msra.mxu0 0.0
    %303 = vmatprep.subr.mxu0 0.0
    %304 = vmatpush1.msra.mxu0 0.0
    %305 = vmatprep.subr.mxu0 0.0
    %306 = vmatpush1.msra.mxu0 0.0
    %307 = vmatprep.subr.mxu0 0.0
    %308 = vmatpush1.msra.mxu0 0.0
    %309 = vmatprep.subr.mxu0 0.0
    %310 = vmatpush1.msra.mxu0 0.0
    %311 = vmatprep.subr.mxu0 0.0
    %312 = vmatpush1.msra.mxu0 0.0
    %313 = vmatprep.subr.mxu0 0.0
    %314 = vmatpush1.msra.mxu0 0.0
    %315 = vmatprep.subr.mxu0 0.0
    %316 = vmatpush1.msra.mxu0 0.0
    %317 = vmatprep.mubr.f32.mxu0 0.0
    %318 = vmatmul.mubr.f32.gmra.mrb[0].mxu0 %v246
    %v319 = vpop.f32.mrb[0].mxu0
    %v320 = vadd.f32 %v251, %v319
    %v321 = vpop.f32.mrb[0].mxu0
    %322 = vdwg.mxu0
    %v323 = vmax.f32 %v320, 0.0
    %v325 = vlaneseq
    %v326 = vshrl.u32 %v325, 7
    %v327 = vsub.s32 0, %v326
    %v328 = vrot.slane %v82, %v327
    %v330 = vmul.f32 %v323, %v328
    %331 = vadd.xlane.f32.xlu0 %v330
    %v332 = vpop.xlane.xlu0 %331
    %v333 = vstv %s83
    %v334 = vadd.f32 %v332, %v333
    %vm335 = vcmask 7168
    %336 = vst.msk [vmem:[%s9] sm:$0xff] %vm335, %v334
    // Predicated region
    $region46: #{tpu_custom_call.1} parent=1 // pred_check
      _
    $region47: #{tpu_custom_call.1} parent=1 // pred_check_branch
      %338 = sbr.rel (0) target = $region49
    $region48: #{tpu_custom_call.1} parent=1 // pred_region
      _
    $region49: #{tpu_custom_call.1} parent=1 // pred_fallthru
      _
    // Predicated region
    $region50: #{tpu_custom_call.1} parent=1 // pred_check
      _
    $region51: #{tpu_custom_call.1} parent=1 // pred_check_branch
      %340 = sbr.rel (0) target = $region53
    $region52: #{tpu_custom_call.1} parent=1 // pred_region
      _
    $region53: #{tpu_custom_call.1} parent=1 // pred_fallthru
      _
    %341 = vsyncpa [#allocation4], 1
    %342 = vsyncpa [#allocation6], 1

</llo_original>
